<compile_context>
chip_gen: v7x
topology: tpu7x:2x2x1
jax: 0.10.0
libtpu: 0.0.40
codegen_flags: <defaults>
</compile_context>

<pallas_src>
import jax
import jax.numpy as jnp
from jax.experimental import pallas as pl
from jax.experimental.pallas import tpu as pltpu


def _arctanh_kernel(x_ref, o_ref):
    # Upcast to f32 for the divide/log (compute is free -- kernel is HBM-bound),
    # cast back to the storage dtype on the way out.
    # NOTE: a float64 input (with x64 enabled) is computed in f32 here; TPU has
    # no f64 vector path. Fine at the 1e-5 tolerance this module is used with.
    x = x_ref[...].astype(jnp.float32)
    # (1+x) * recip(1-x): keeps the reciprocal on the EUP slot (otherwise idle
    # except for the log). approx=False -- arctanh is ill-conditioned near |x|->1,
    # so do not switch to the approximate vrcp without re-validating tolerance.
    r = pl.reciprocal(1.0 - x, approx=False)
    y = 0.5 * jnp.log((1.0 + x) * r)  # same formula as the PyTorch forward
    o_ref[...] = y.astype(o_ref.dtype)


def _round_up(a, b):
    return (a + b - 1) // b * b


def _arctanh_jnp(x_flat, orig_dtype):
    # Tiny-tail path (< 128 elements): plain jnp, same f32 math as the kernel.
    xf = x_flat.astype(jnp.float32)
    return (0.5 * jnp.log((1.0 + xf) / (1.0 - xf))).astype(orig_dtype)


def arctanh_pallas(x, *, target_block_bytes=4 * 1024 * 1024):
    """Elementwise arctanh via a Pallas TPU kernel. Accepts any shape / float dtype.

    target_block_bytes ~4 MiB sits at the HBM-roofline asymptote on v5e/v6e and
    is a good default on v7x too (raise to 8 MiB + vmem_limit_bytes=48 MiB there
    if xprof still shows exposed per-step overhead).
    """
    orig_shape = x.shape
    orig_dtype = x.dtype
    n = x.size
    if n == 0:
        return x

    x_flat = jnp.ravel(x)

    # Widest lane-dense column count that divides n exactly -> no wrapper-side
    # pad/copy pass in the common case.  Otherwise run the kernel over the bulk
    # (n // 128 * 128 elements) and do the <128-element tail with plain jnp.
    lanes = 128
    for c in (1024, 512, 256, 128):
        if n % c == 0:
            lanes = c
            break
    bulk = (n // lanes) * lanes
    tail = n - bulk

    out_parts = []
    if bulk > 0:
        x_bulk = x_flat if tail == 0 else x_flat[:bulk]
        rows = bulk // lanes
        x2d = x_bulk.reshape(rows, lanes)

        # Size blocks by the REAL storage itemsize (bf16 blocks were previously
        # half the intended HBM footprint), and keep rows on the packed-dtype
        # native sublane multiple (8 for f32, 16 for bf16, 32 for int8/fp8).
        itemsize = jnp.dtype(orig_dtype).itemsize
        sublane = max(8, 32 // max(itemsize, 1))
        target_rows = max(
            sublane, (target_block_bytes // (lanes * itemsize)) // sublane * sublane
        )
        # Cap the tile so medium tensors still produce >= ~4 grid steps: keeps
        # both v7x TensorCores fed (dimension_semantics=("parallel",) shards the
        # row axis across TCs) and keeps the pipeline double-buffered. Harmless
        # no-op on single-TC v5e/v6e.
        cap = _round_up(pl.cdiv(rows, 4), sublane)
        tile_rows = max(sublane, min(target_rows, cap))
        if tile_rows >= rows:
            tile_rows = rows  # single full-extent block (any row count is legal)
        grid = (pl.cdiv(rows, tile_rows),)  # ragged last block -> Pallas masks writes

        out2d = pl.pallas_call(
            _arctanh_kernel,
            out_shape=jax.ShapeDtypeStruct((rows, lanes), orig_dtype),
            grid_spec=pltpu.PrefetchScalarGridSpec(
                num_scalar_prefetch=0,
                grid=grid,
                in_specs=[pl.BlockSpec((tile_rows, lanes), lambda i: (i, 0))],
                out_specs=pl.BlockSpec((tile_rows, lanes), lambda i: (i, 0)),
            ),
            compiler_params=pltpu.CompilerParams(
                dimension_semantics=("parallel",),
                # Double-buffered in + out at 4 MiB blocks = 16 MiB of buffers:
                # above v5e's 16 MiB default scoped VMEM, well under every
                # generation's physical VMEM (v7x: 64 MiB).
                vmem_limit_bytes=32 * 1024 * 1024,
            ),
        )(x2d)
        out_parts.append(out2d.reshape(-1))

    if tail > 0:
        # <128 leftover elements: not worth an HBM pad pass, do them in jnp.
        out_parts.append(_arctanh_jnp(x_flat[bulk:], orig_dtype))

    out_flat = out_parts[0] if len(out_parts) == 1 else jnp.concatenate(out_parts)
    return out_flat.reshape(orig_shape)


if __name__ == "__main__":
    key = jax.random.PRNGKey(0)
    # Small NCHW input, values in (-1, 1) so arctanh is finite (matches torch domain).
    x = jax.random.uniform(
        key, (2, 4, 16, 16), dtype=jnp.float32, minval=-0.9, maxval=0.9
    )

    y = arctanh_pallas(x)
    y = jax.block_until_ready(y)

    # Reference check in plain JAX (same formula as the PyTorch module).
    y_ref = 0.5 * jnp.log((1.0 + x) / (1.0 - x))
    assert y.shape == x.shape and y.dtype == x.dtype
    assert jnp.allclose(y, y_ref, atol=1e-5, rtol=1e-5)

    print("KERNEL_OK")
</pallas_src>

<mosaic_0001>
module attributes {stable_mosaic.version = 11 : i64} {
  func.func @_arctanh_kernel(%arg0: i32, %arg1: memref<2x1024xf32, #tpu.memory_space<vmem>>, %arg2: memref<2x1024xf32, #tpu.memory_space<vmem>>) attributes {dimension_semantics = [#tpu.dimension_semantics<parallel>], iteration_bounds = array<i64: 1>, scalar_prefetch = 0 : i64, scratch_operands = 0 : i64, tpu.core_type = #tpu.core_type<tc>, window_params = [{transform_indices = @transform_0, window_bounds = array<i64: 2, 1024>}, {transform_indices = @transform_1, window_bounds = array<i64: 2, 1024>}]} {
    %c0 = arith.constant 0 : index
    %c0_0 = arith.constant 0 : index
    %0 = vector.load %arg1[%c0, %c0_0] : memref<2x1024xf32, #tpu.memory_space<vmem>>, vector<2x1024xf32>
    %cst = arith.constant 1.000000e+00 : f32
    %1 = vector.broadcast %cst : f32 to vector<2x1024xf32>
    %2 = arith.subf %1, %0 : vector<2x1024xf32>
    %3 = tpu.reciprocal %2 : vector<2x1024xf32> -> vector<2x1024xf32>
    %cst_1 = arith.constant 1.000000e+00 : f32
    %4 = vector.broadcast %cst_1 : f32 to vector<2x1024xf32>
    %5 = arith.addf %4, %0 : vector<2x1024xf32>
    %6 = arith.mulf %5, %3 : vector<2x1024xf32>
    %7 = math.log %6 : vector<2x1024xf32>
    %cst_2 = arith.constant 5.000000e-01 : f32
    %8 = vector.broadcast %cst_2 : f32 to vector<2x1024xf32>
    %9 = arith.mulf %8, %7 : vector<2x1024xf32>
    %c0_3 = arith.constant 0 : index
    %c0_4 = arith.constant 0 : index
    %10 = vector.load %arg2[%c0_3, %c0_4] : memref<2x1024xf32, #tpu.memory_space<vmem>>, vector<2x1024xf32>
    tpu.vector_store %arg2[%c0_3, %c0_4], %9 {strides = array<i32>} : memref<2x1024xf32, #tpu.memory_space<vmem>>, vector<2x1024xf32>,
    return
  }
  func.func @transform_0(%arg0: i32) -> (i32, i32) {
    %c0_i32 = arith.constant 0 : i32
    %c0_i32_0 = arith.constant 0 : i32
    return %arg0, %c0_i32 : i32, i32
  }
  func.func @transform_1(%arg0: i32) -> (i32, i32) {
    %c0_i32 = arith.constant 0 : i32
    %c0_i32_0 = arith.constant 0 : i32
    return %arg0, %c0_i32 : i32, i32
  }
}

</mosaic_0001>

<llo_original>
// kernel: tpu_custom_call.1
$region0: #{tpu_custom_call.1}
  #allocation0 [shape = 'u32[]', space=smem, size = 0x4, offset = 0x4, fixed_abs, tag = 'smem constant byte address 0x4 - core index']
  #allocation1 [shape = 'u32[144,128]{1,0:T(1,128)}', space=vmem, size = 0x12000, scoped, tag = 'internal scratch']
  %s0 = inlined_call_operand.hbm [shape: f32[2,1024], index: 0, kind: input, shape index: {}]
  %s1 = inlined_call_operand.hbm [shape: f32[2,1024], index: 1, kind: output, shape index: {}]
  %s2 = sld [smem:[#allocation0]]
  $region18: #{tpu_custom_call.1} parent=0
    _
  %s4 = ssub.s32 1, %s2
  %s5 = scalar_select 0, %s4, %s2
  $region1: #{tpu_custom_call.1} parent=0
    #allocation2 [shape = 'u8[8192]{0}', space=vmem, size = 0x2000, scoped, tag = 'input window, operand 0, single buffered']
    #allocation3 [shape = 's32[1]{0}', space=sflag, size = 0x4, scoped, tag = 'scoped memory for tpu_custom_call.1']
    #allocation4 [shape = 's32[1]{0}', space=sflag, size = 0x4, scoped, tag = 'scoped memory for tpu_custom_call.1']
    #allocation5 [shape = 'u8[8192]{0}', space=vmem, size = 0x2000, scoped, tag = 'output window, operand 0, single buffered']
    %6 = vsyncpa [#allocation3], 0
    %7 = vsyncpa [#allocation4], 0
    // Predicated region
    $region2: #{tpu_custom_call.1} parent=1 // pred_check
      _
    $region3: #{tpu_custom_call.1} parent=1 // pred_check_branch
      %9 = sbr.rel (0) target = $region5
    $region4: #{tpu_custom_call.1} parent=1 // pred_region
      %s11 = ssub.s32 256, 256
      %12 = vsyncadd [#allocation3], %s11
      %s14 = sshll.u32 [#allocation2], 4
      %s15 = int_to_ptr.vmem [resolvable:$true] %s14
      %17 = dma.hbm_to_vmem [thread:$0]  %s0, 256, %s15, [#allocation3]
    $region5: #{tpu_custom_call.1} parent=1 // pred_fallthru
      _
    // Predicated region
    $region6: #{tpu_custom_call.1} parent=1 // pred_check
      _
    $region7: #{tpu_custom_call.1} parent=1 // pred_check_branch
      %19 = sbr.rel (0) target = $region9
    $region8: #{tpu_custom_call.1} parent=1 // pred_region
      %20 = dma.done [#allocation3], 256
    $region9: #{tpu_custom_call.1} parent=1 // pred_fallthru
      _
    %v21 = vld [vmem:[#allocation2] sm:$0xff]
    %v22 = vld [vmem:[#allocation2 + $0x8] sm:$0xff]
    %v23 = vsub.f32 1.0, %v21
    %v24 = vsub.f32 1.0, %v22
    %v25 = vrcp.pop %v23
    %v26 = vrcp.pop %v24
    %v27 = vadd.f32 %v21, 1.0
    %v28 = vadd.f32 %v22, 1.0
    %v29 = vmul.f32 %v27, %v25
    %v30 = vmul.f32 %v28, %v26
    %v31 = vlog2.pop %v29
    %v32 = vmul.f32 %v31, 0.6931472
    %v33 = vlog2.pop %v30
    %v34 = vmul.f32 %v33, 0.6931472
    %v35 = vmul.f32 %v32, 0.5
    %v36 = vmul.f32 %v34, 0.5
    %37 = vst [vmem:[#allocation5] sm:$0xff] %v35
    %38 = vst [vmem:[#allocation5 + $0x8] sm:$0xff] %v36
    // Predicated region
    $region10: #{tpu_custom_call.1} parent=1 // pred_check
      _
    $region11: #{tpu_custom_call.1} parent=1 // pred_check_branch
      %40 = sbr.rel (0) target = $region13
    $region12: #{tpu_custom_call.1} parent=1 // pred_region
      %s42 = ssub.s32 256, 256
      %43 = vsyncadd [#allocation4], %s42
      %s45 = sshll.u32 [#allocation5], 4
      %s46 = int_to_ptr.vmem [resolvable:$true] %s45
      %48 = dma.vmem_to_hbm [thread:$0]  %s46, 256, %s1, [#allocation4]
    $region13: #{tpu_custom_call.1} parent=1 // pred_fallthru
      _
    // Predicated region
    $region14: #{tpu_custom_call.1} parent=1 // pred_check
      _
    $region15: #{tpu_custom_call.1} parent=1 // pred_check_branch
      %50 = sbr.rel (0) target = $region17
    $region16: #{tpu_custom_call.1} parent=1 // pred_region
      %51 = dma.done [#allocation4], 256
    $region17: #{tpu_custom_call.1} parent=1 // pred_fallthru
      _
    %52 = vsyncpa [#allocation3], 1
    %53 = vsyncpa [#allocation4], 1

</llo_original>
